<compile_context>
chip_gen: v6e
topology: v6e:2x2x1
jax: 0.10.0
libtpu: 0.0.40
codegen_flags: <defaults>
</compile_context>

<pallas_src>
import functools

import jax
import jax.numpy as jnp
from jax.experimental import pallas as pl
from jax.experimental.pallas import tpu as pltpu

IN_DIM = 32
HIDDEN = 256


def _round_up(n, m):
    return ((n + m - 1) // m) * m


def _sp_regressor_kernel(x_ref, w1_ref, b1_ref, w2_ref, b2_ref, out_ref, *,
                         discrete_opt):
    # lin1 + ReLU (32 -> 256), f32 with f32 accumulation.
    h = jnp.dot(x_ref[...], w1_ref[...],
                preferred_element_type=jnp.float32) + b1_ref[...]
    h = jnp.maximum(h, 0.0)

    # lin2 (256 -> out_dim); only the real columns are computed and stored.
    z = jnp.dot(h, w2_ref[...],
                preferred_element_type=jnp.float32) + b2_ref[...]

    if discrete_opt:
        out_ref[...] = z.astype(out_ref.dtype)
    else:
        out_ref[...] = (0.5 * jnp.tanh(z)).astype(out_ref.dtype)


def sp_regressor_light(x, params, *, discrete_opt=False, block_b=1024):
    """x: [B, 32] float32. params: dict with w1[32,256], b1[1,256],
    w2[256,out_dim], b2[1,out_dim]. Returns [B, out_dim] float32."""
    B, in_dim = x.shape
    assert in_dim == IN_DIM
    w1, b1, w2, b2 = params["w1"], params["b1"], params["w2"], params["b2"]
    out_dim = w2.shape[1]

    # Batch tile selection:
    #   * B <= block_b: a single full-array block (always a legal block shape,
    #     no padding, one grid step).
    #   * B >  block_b: cap at block_b but keep >= 4 grid steps so the
    #     "parallel" batch axis can shard across v7x's two TensorCores while
    #     still double-buffering within each core.
    if B <= block_b:
        TB = B
    else:
        TB = min(block_b, _round_up(pl.cdiv(B, 4), 8))
    grid = (pl.cdiv(B, TB),)  # ragged last block is fine: rows are independent.

    kernel = functools.partial(_sp_regressor_kernel, discrete_opt=discrete_opt)

    bytes_accessed = (B * IN_DIM * 4                                 # x read
                      + (IN_DIM * HIDDEN + HIDDEN * out_dim) * 4     # weights
                      + (HIDDEN + out_dim) * 4                       # biases
                      + B * out_dim * 4)                             # y write
    cost = pl.CostEstimate(
        flops=2 * B * (IN_DIM * HIDDEN + HIDDEN * out_dim),
        transcendentals=0 if discrete_opt else B * out_dim,
        bytes_accessed=bytes_accessed,
    )

    y = pl.pallas_call(
        kernel,
        out_shape=jax.ShapeDtypeStruct((B, out_dim), jnp.float32),
        grid_spec=pltpu.PrefetchScalarGridSpec(
            num_scalar_prefetch=0,
            grid=grid,
            in_specs=[
                pl.BlockSpec((TB, IN_DIM), lambda i: (i, 0)),        # x tile
                pl.BlockSpec((IN_DIM, HIDDEN), lambda i: (0, 0)),    # W1 (resident)
                pl.BlockSpec((1, HIDDEN), lambda i: (0, 0)),         # b1 (resident)
                pl.BlockSpec((HIDDEN, out_dim), lambda i: (0, 0)),   # W2 (resident)
                pl.BlockSpec((1, out_dim), lambda i: (0, 0)),        # b2 (resident)
            ],
            out_specs=pl.BlockSpec((TB, out_dim), lambda i: (i, 0)),
        ),
        compiler_params=pltpu.CompilerParams(
            dimension_semantics=("parallel",)),
        cost_estimate=cost,
    )(x, w1, b1, w2, b2)

    return y


def init_params(key, *, discrete_opt=False):
    """Mirrors nn.Linear default init (uniform +/- 1/sqrt(fan_in)).
    Weights stored as [in, out]; biases as [1, out]."""
    out_dim = 7 if discrete_opt else 2
    ks = jax.random.split(key, 4)

    def linear(kw, kb, fan_in, fan_out):
        bound = 1.0 / jnp.sqrt(jnp.float32(fan_in))
        w = jax.random.uniform(kw, (fan_in, fan_out), jnp.float32, -bound, bound)
        b = jax.random.uniform(kb, (1, fan_out), jnp.float32, -bound, bound)
        return w, b

    w1, b1 = linear(ks[0], ks[1], IN_DIM, HIDDEN)
    w2, b2 = linear(ks[2], ks[3], HIDDEN, out_dim)
    return {"w1": w1, "b1": b1, "w2": w2, "b2": b2}


def _reference(x, p, *, discrete_opt):
    # Pure-JAX f32 reference matching the PyTorch module.
    h = jnp.maximum(jnp.dot(x, p["w1"]) + p["b1"], 0.0)
    z = jnp.dot(h, p["w2"]) + p["b2"]
    return z if discrete_opt else 0.5 * jnp.tanh(z)


if __name__ == "__main__":
    key = jax.random.PRNGKey(0)
    k_x, k_p, k_x2 = jax.random.split(key, 3)

    # Small single-block case.
    B = 16
    x = jax.random.normal(k_x, (B, IN_DIM), jnp.float32)
    for discrete in (False, True):
        params = init_params(k_p, discrete_opt=discrete)
        y = sp_regressor_light(x, params, discrete_opt=discrete)
        jax.block_until_ready(y)
        y_ref = _reference(x, params, discrete_opt=discrete)
        out_dim = 7 if discrete else 2
        assert y.shape == (B, out_dim), y.shape
        assert jnp.allclose(y, y_ref, atol=2e-3, rtol=2e-3), float(
            jnp.max(jnp.abs(y - y_ref)))

    # Multi-step grid with a ragged last block (exercises the pipelined path).
    B2 = 2500
    x2 = jax.random.normal(k_x2, (B2, IN_DIM), jnp.float32)
    params = init_params(k_p, discrete_opt=False)
    y2 = sp_regressor_light(x2, params, discrete_opt=False, block_b=256)
    jax.block_until_ready(y2)
    y2_ref = _reference(x2, params, discrete_opt=False)
    assert y2.shape == (B2, 2), y2.shape
    assert jnp.allclose(y2, y2_ref, atol=2e-3, rtol=2e-3), float(
        jnp.max(jnp.abs(y2 - y2_ref)))

    print("KERNEL_OK")
</pallas_src>

<mosaic_0001>
module attributes {stable_mosaic.version = 11 : i64} {
  func.func @_sp_regressor_kernel(%arg0: i32, %arg1: memref<16x32xf32, #tpu.memory_space<vmem>>, %arg2: memref<32x256xf32, #tpu.memory_space<vmem>>, %arg3: memref<1x256xf32, #tpu.memory_space<vmem>>, %arg4: memref<256x2xf32, #tpu.memory_space<vmem>>, %arg5: memref<1x2xf32, #tpu.memory_space<vmem>>, %arg6: memref<16x2xf32, #tpu.memory_space<vmem>>) attributes {dimension_semantics = [#tpu.dimension_semantics<parallel>], iteration_bounds = array<i64: 1>, scalar_prefetch = 0 : i64, scratch_operands = 0 : i64, tpu.core_type = #tpu.core_type<tc>, window_params = [{transform_indices = @transform_0, window_bounds = array<i64: 16, 32>}, {pipeline_mode = #tpu.pipeline_mode<synchronous>, transform_indices = @transform_1, window_bounds = array<i64: 32, 256>}, {pipeline_mode = #tpu.pipeline_mode<synchronous>, transform_indices = @transform_2, window_bounds = array<i64: 1, 256>}, {pipeline_mode = #tpu.pipeline_mode<synchronous>, transform_indices = @transform_3, window_bounds = array<i64: 256, 2>}, {pipeline_mode = #tpu.pipeline_mode<synchronous>, transform_indices = @transform_4, window_bounds = array<i64: 1, 2>}, {transform_indices = @transform_5, window_bounds = array<i64: 16, 2>}]} {
    %c0 = arith.constant 0 : index
    %c0_0 = arith.constant 0 : index
    %0 = vector.load %arg1[%c0, %c0_0] : memref<16x32xf32, #tpu.memory_space<vmem>>, vector<16x32xf32>
    %c0_1 = arith.constant 0 : index
    %c0_2 = arith.constant 0 : index
    %1 = vector.load %arg2[%c0_1, %c0_2] : memref<32x256xf32, #tpu.memory_space<vmem>>, vector<32x256xf32>
    %cst = arith.constant dense<0.000000e+00> : vector<16x256xf32>
    %2 = tpu.matmul %0, %1, %cst {dimension_numbers = #tpu.dot_dimension_numbers<[1], [0], [0], [1], [0, 0, 1, 1], [], []>} : vector<16x32xf32>, vector<32x256xf32>, vector<16x256xf32> -> vector<16x256xf32>
    %c0_3 = arith.constant 0 : index
    %c0_4 = arith.constant 0 : index
    %3 = vector.load %arg3[%c0_3, %c0_4] : memref<1x256xf32, #tpu.memory_space<vmem>>, vector<1x256xf32>
    %4 = vector.broadcast %3 : vector<1x256xf32> to vector<16x256xf32>
    %5 = arith.addf %2, %4 : vector<16x256xf32>
    %cst_5 = arith.constant 0.000000e+00 : f32
    %6 = vector.broadcast %cst_5 : f32 to vector<16x256xf32>
    %7 = arith.maximumf %5, %6 : vector<16x256xf32>
    %c0_6 = arith.constant 0 : index
    %c0_7 = arith.constant 0 : index
    %8 = vector.load %arg4[%c0_6, %c0_7] : memref<256x2xf32, #tpu.memory_space<vmem>>, vector<256x2xf32>
    %cst_8 = arith.constant dense<0.000000e+00> : vector<16x2xf32>
    %9 = tpu.matmul %7, %8, %cst_8 {dimension_numbers = #tpu.dot_dimension_numbers<[1], [0], [0], [1], [0, 0, 1, 1], [], []>} : vector<16x256xf32>, vector<256x2xf32>, vector<16x2xf32> -> vector<16x2xf32>
    %c0_9 = arith.constant 0 : index
    %c0_10 = arith.constant 0 : index
    %10 = vector.load %arg5[%c0_9, %c0_10] : memref<1x2xf32, #tpu.memory_space<vmem>>, vector<1x2xf32>
    %11 = vector.broadcast %10 : vector<1x2xf32> to vector<16x2xf32>
    %12 = arith.addf %9, %11 : vector<16x2xf32>
    %13 = math.tanh %12 : vector<16x2xf32>
    %cst_11 = arith.constant 5.000000e-01 : f32
    %14 = vector.broadcast %cst_11 : f32 to vector<16x2xf32>
    %15 = arith.mulf %14, %13 : vector<16x2xf32>
    %c0_12 = arith.constant 0 : index
    %c0_13 = arith.constant 0 : index
    %16 = vector.load %arg6[%c0_12, %c0_13] : memref<16x2xf32, #tpu.memory_space<vmem>>, vector<16x2xf32>
    tpu.vector_store %arg6[%c0_12, %c0_13], %15 {strides = array<i32>} : memref<16x2xf32, #tpu.memory_space<vmem>>, vector<16x2xf32>,
    return
  }
  func.func @transform_0(%arg0: i32) -> (i32, i32) {
    %c0_i32 = arith.constant 0 : i32
    %c0_i32_0 = arith.constant 0 : i32
    return %arg0, %c0_i32 : i32, i32
  }
  func.func @transform_1(%arg0: i32) -> (i32, i32) {
    %c0_i32 = arith.constant 0 : i32
    %c0_i32_0 = arith.constant 0 : i32
    %c0_i32_1 = arith.constant 0 : i32
    return %c0_i32, %c0_i32_0 : i32, i32
  }
  func.func @transform_2(%arg0: i32) -> (i32, i32) {
    %c0_i32 = arith.constant 0 : i32
    %c0_i32_0 = arith.constant 0 : i32
    %c0_i32_1 = arith.constant 0 : i32
    return %c0_i32, %c0_i32_0 : i32, i32
  }
  func.func @transform_3(%arg0: i32) -> (i32, i32) {
    %c0_i32 = arith.constant 0 : i32
    %c0_i32_0 = arith.constant 0 : i32
    %c0_i32_1 = arith.constant 0 : i32
    return %c0_i32, %c0_i32_0 : i32, i32
  }
  func.func @transform_4(%arg0: i32) -> (i32, i32) {
    %c0_i32 = arith.constant 0 : i32
    %c0_i32_0 = arith.constant 0 : i32
    %c0_i32_1 = arith.constant 0 : i32
    return %c0_i32, %c0_i32_0 : i32, i32
  }
  func.func @transform_5(%arg0: i32) -> (i32, i32) {
    %c0_i32 = arith.constant 0 : i32
    %c0_i32_0 = arith.constant 0 : i32
    return %arg0, %c0_i32 : i32, i32
  }
}

</mosaic_0001>

<llo_original>
// kernel: tpu_custom_call.1
$region0: #{tpu_custom_call.1}
  #allocation0 [shape = 'u32[]', space=smem, size = 0x4, offset = 0x4, fixed_abs, tag = 'smem constant byte address 0x4 - core index']
  #allocation1 [shape = 'u32[144,128]{1,0:T(1,128)}', space=vmem, size = 0x12000, scoped, tag = 'internal scratch']
  %s0 = inlined_call_operand.vmem [shape: f32[16,32], index: 0, kind: input, shape index: {}]
  %s1 = inlined_call_operand.vmem [shape: f32[32,256], index: 1, kind: input, shape index: {}]
  %s2 = inlined_call_operand.vmem [shape: f32[1,256], index: 2, kind: input, shape index: {}]
  %s3 = inlined_call_operand.vmem [shape: f32[256,2], index: 3, kind: input, shape index: {}]
  %s4 = inlined_call_operand.vmem [shape: f32[1,2], index: 4, kind: input, shape index: {}]
  %s5 = inlined_call_operand.vmem [shape: f32[16,2], index: 5, kind: output, shape index: {}]
  %s6 = sld [smem:[#allocation0]]
  $region30: #{tpu_custom_call.1} parent=0
    _
  %s8 = ssub.s32 1, %s6
  %s9 = scalar_select 0, %s8, %s6
  // Predicated region
  $region2: #{tpu_custom_call.1} parent=0 // pred_check
    _
  $region3: #{tpu_custom_call.1} parent=0 // pred_check_branch
    %11 = sbr.rel (0) target = $region5
  $region4: #{tpu_custom_call.1} parent=0 // pred_region
    _
  $region5: #{tpu_custom_call.1} parent=0 // pred_fallthru
    _
  // Predicated region
  $region6: #{tpu_custom_call.1} parent=0 // pred_check
    _
  $region7: #{tpu_custom_call.1} parent=0 // pred_check_branch
    %13 = sbr.rel (0) target = $region9
  $region8: #{tpu_custom_call.1} parent=0 // pred_region
    _
  $region9: #{tpu_custom_call.1} parent=0 // pred_fallthru
    _
  // Predicated region
  $region10: #{tpu_custom_call.1} parent=0 // pred_check
    _
  $region11: #{tpu_custom_call.1} parent=0 // pred_check_branch
    %15 = sbr.rel (0) target = $region13
  $region12: #{tpu_custom_call.1} parent=0 // pred_region
    _
  $region13: #{tpu_custom_call.1} parent=0 // pred_fallthru
    _
  // Predicated region
  $region14: #{tpu_custom_call.1} parent=0 // pred_check
    _
  $region15: #{tpu_custom_call.1} parent=0 // pred_check_branch
    %17 = sbr.rel (0) target = $region17
  $region16: #{tpu_custom_call.1} parent=0 // pred_region
    _
  $region17: #{tpu_custom_call.1} parent=0 // pred_fallthru
    _
  // Predicated region
  $region18: #{tpu_custom_call.1} parent=0 // pred_check
    _
  $region19: #{tpu_custom_call.1} parent=0 // pred_check_branch
    %19 = sbr.rel (0) target = $region21
  $region20: #{tpu_custom_call.1} parent=0 // pred_region
    _
  $region21: #{tpu_custom_call.1} parent=0 // pred_fallthru
    _
  %v20 = vld [vmem:[%s0] sm:$0xff]
  %v21 = vld [vmem:[%s0 + $0x8] sm:$0xff]
  %v22 = vld [vmem:[%s1] sm:$0xff]
  %v23 = vld [vmem:[%s1 + $0x8] sm:$0xff]
  %v24 = vld [vmem:[%s1 + $0x10] sm:$0xff]
  %v25 = vld [vmem:[%s1 + $0x18] sm:$0xff]
  %v26 = vld [vmem:[%s1 + $0x20] sm:$0xff]
  %v27 = vld [vmem:[%s1 + $0x28] sm:$0xff]
  %v28 = vld [vmem:[%s1 + $0x30] sm:$0xff]
  %v29 = vld [vmem:[%s1 + $0x38] sm:$0xff]
  %v30 = vld [vmem:[%s2] sm:$0x3]
  %v32 = vlaneseq
  %v33 = vshrl.u32 %v32, 7
  %v34 = vsub.s32 0, %v33
  %v35 = vrot.slane %v30, %v34
  %v36 = vlaneseq
  %v37 = vshrl.u32 %v36, 7
  %v38 = vsub.s32 1, %v37
  %v39 = vrot.slane %v30, %v38
  %vm42 = vcmask 261120
  %v44 = vsel %vm42, %v20, 0
  %v47 = vsel %vm42, %v21, 0
  %49 = vmatprep.subr.mxu0 0.0
  %50 = vmatpush1.msra.mxu0 0.0
  %51 = vmatprep.subr.mxu0 0.0
  %52 = vmatpush1.msra.mxu0 0.0
  %53 = vmatprep.subr.mxu0 0.0
  %54 = vmatpush1.msra.mxu0 0.0
  %55 = vmatprep.subr.mxu0 0.0
  %56 = vmatpush1.msra.mxu0 0.0
  %57 = vmatprep.subr.mxu0 0.0
  %58 = vmatpush1.msra.mxu0 0.0
  %59 = vmatprep.subr.mxu0 0.0
  %60 = vmatpush1.msra.mxu0 0.0
  %61 = vmatprep.subr.mxu0 0.0
  %62 = vmatpush1.msra.mxu0 0.0
  %63 = vmatprep.subr.mxu0 0.0
  %64 = vmatpush1.msra.mxu0 0.0
  %65 = vmatprep.subr.mxu0 0.0
  %66 = vmatpush1.msra.mxu0 0.0
  %67 = vmatprep.subr.mxu0 0.0
  %68 = vmatpush1.msra.mxu0 0.0
  %69 = vmatprep.subr.mxu0 0.0
  %70 = vmatpush1.msra.mxu0 0.0
  %71 = vmatprep.subr.mxu0 0.0
  %72 = vmatpush1.msra.mxu0 0.0
  %73 = vmatprep.subr.mxu0 %v29
  %74 = vmatpush1.msra.mxu0 %v28
  %75 = vmatprep.subr.mxu0 %v27
  %76 = vmatpush1.msra.mxu0 %v26
  %77 = vmatprep.subr.mxu0 %v25
  %78 = vmatpush1.msra.mxu0 %v24
  %79 = vmatprep.subr.mxu0 %v23
  %80 = vmatpush1.msra.mxu0 %v22
  %81 = vmatprep.subr.mxu0 0.0
  %82 = vmatpush2.msra.mxu0 0.0
  %83 = vmatprep.subr.mxu0 0.0
  %84 = vmatpush2.msra.mxu0 0.0
  %85 = vmatprep.subr.mxu0 0.0
  %86 = vmatpush2.msra.mxu0 0.0
  %87 = vmatprep.subr.mxu0 0.0
  %88 = vmatpush2.msra.mxu0 0.0
  %89 = vmatprep.subr.mxu0 0.0
  %90 = vmatpush2.msra.mxu0 0.0
  %91 = vmatprep.subr.mxu0 0.0
  %92 = vmatpush2.msra.mxu0 0.0
  %93 = vmatprep.subr.mxu0 0.0
  %94 = vmatpush2.msra.mxu0 0.0
  %95 = vmatprep.subr.mxu0 0.0
  %96 = vmatpush2.msra.mxu0 0.0
  %97 = vmatprep.subr.mxu0 0.0
  %98 = vmatpush2.msra.mxu0 0.0
  %99 = vmatprep.subr.mxu0 0.0
  %100 = vmatpush2.msra.mxu0 0.0
  %101 = vmatprep.subr.mxu0 0.0
  %102 = vmatpush2.msra.mxu0 0.0
  %103 = vmatprep.subr.mxu0 0.0
  %104 = vmatpush2.msra.mxu0 0.0
  %105 = vmatprep.subr.mxu0 0.0
  %106 = vmatpush2.msra.mxu0 0.0
  %107 = vmatprep.subr.mxu0 0.0
  %108 = vmatpush2.msra.mxu0 0.0
  %109 = vmatprep.subr.mxu0 0.0
  %110 = vmatpush2.msra.mxu0 0.0
  %111 = vmatprep.subr.mxu0 0.0
  %112 = vmatpush2.msra.mxu0 0.0
  %113 = vmatprep.mubr.f32.mxu0 0.0
  %114 = vmatmul.mubr.f32.gmra.mxu0 %v44
  %v115 = vpop.f32.mrf.mxu0
  %v116 = vadd.f32 %v35, %v115
  %v117 = vpop.f32.mrf.mxu0
  %v118 = vadd.f32 %v39, %v117
  %119 = vmatprep.mubr.f32.mxu0 0.0
  %120 = vmatmul.mubr.f32.gmra.mxu0 %v47
  %v121 = vpop.f32.mrf.mxu0
  %v122 = vadd.f32 %v35, %v121
  %v123 = vpop.f32.mrf.mxu0
  %v124 = vadd.f32 %v39, %v123
  %125 = vdwg.mxu0
  %v126 = vmax.f32 %v116, 0.0
  %v127 = vmax.f32 %v118, 0.0
  %v128 = vmax.f32 %v122, 0.0
  %v129 = vmax.f32 %v124, 0.0
  %v130 = vld [vmem:[%s3] sm:$0xff]
  %v131 = vld [vmem:[%s3 + $0x8] sm:$0xff]
  %v132 = vld [vmem:[%s3 + $0x10] sm:$0xff]
  %v133 = vld [vmem:[%s3 + $0x18] sm:$0xff]
  %v134 = vld [vmem:[%s3 + $0x20] sm:$0xff]
  %v135 = vld [vmem:[%s3 + $0x28] sm:$0xff]
  %v136 = vld [vmem:[%s3 + $0x30] sm:$0xff]
  %v137 = vld [vmem:[%s3 + $0x38] sm:$0xff]
  %v138 = vld [vmem:[%s3 + $0x40] sm:$0xff]
  %v139 = vld [vmem:[%s3 + $0x48] sm:$0xff]
  %v140 = vld [vmem:[%s3 + $0x50] sm:$0xff]
  %v141 = vld [vmem:[%s3 + $0x58] sm:$0xff]
  %v142 = vld [vmem:[%s3 + $0x60] sm:$0xff]
  %v143 = vld [vmem:[%s3 + $0x68] sm:$0xff]
  %v144 = vld [vmem:[%s3 + $0x70] sm:$0xff]
  %v145 = vld [vmem:[%s3 + $0x78] sm:$0xff]
  %v146 = vld [vmem:[%s3 + $0x80] sm:$0xff]
  %v147 = vld [vmem:[%s3 + $0x88] sm:$0xff]
  %v148 = vld [vmem:[%s3 + $0x90] sm:$0xff]
  %v149 = vld [vmem:[%s3 + $0x98] sm:$0xff]
  %v150 = vld [vmem:[%s3 + $0xa0] sm:$0xff]
  %v151 = vld [vmem:[%s3 + $0xa8] sm:$0xff]
  %v152 = vld [vmem:[%s3 + $0xb0] sm:$0xff]
  %v153 = vld [vmem:[%s3 + $0xb8] sm:$0xff]
  %v154 = vld [vmem:[%s3 + $0xc0] sm:$0xff]
  %v155 = vld [vmem:[%s3 + $0xc8] sm:$0xff]
  %v156 = vld [vmem:[%s3 + $0xd0] sm:$0xff]
  %v157 = vld [vmem:[%s3 + $0xd8] sm:$0xff]
  %v158 = vld [vmem:[%s3 + $0xe0] sm:$0xff]
  %v159 = vld [vmem:[%s3 + $0xe8] sm:$0xff]
  %v160 = vld [vmem:[%s3 + $0xf0] sm:$0xff]
  %v161 = vld [vmem:[%s3 + $0xf8] sm:$0xff]
  %v162 = vld [vmem:[%s4] sm:$0x1]
  %v164 = vlaneseq
  %v165 = vshrl.u32 %v164, 7
  %v166 = vsub.s32 0, %v165
  %v167 = vrot.slane %v162, %v166
  %169 = vmatprep.subr.mxu0 0.0
  %170 = vmatpush1.msra.mxu0 %v145
  %171 = vmatprep.subr.mxu0 0.0
  %172 = vmatpush1.msra.mxu0 %v144
  %173 = vmatprep.subr.mxu0 0.0
  %174 = vmatpush1.msra.mxu0 %v143
  %175 = vmatprep.subr.mxu0 0.0
  %176 = vmatpush1.msra.mxu0 %v142
  %177 = vmatprep.subr.mxu0 0.0
  %178 = vmatpush1.msra.mxu0 %v141
  %179 = vmatprep.subr.mxu0 0.0
  %180 = vmatpush1.msra.mxu0 %v140
  %181 = vmatprep.subr.mxu0 0.0
  %182 = vmatpush1.msra.mxu0 %v139
  %183 = vmatprep.subr.mxu0 0.0
  %184 = vmatpush1.msra.mxu0 %v138
  %185 = vmatprep.subr.mxu0 0.0
  %186 = vmatpush1.msra.mxu0 %v137
  %187 = vmatprep.subr.mxu0 0.0
  %188 = vmatpush1.msra.mxu0 %v136
  %189 = vmatprep.subr.mxu0 0.0
  %190 = vmatpush1.msra.mxu0 %v135
  %191 = vmatprep.subr.mxu0 0.0
  %192 = vmatpush1.msra.mxu0 %v134
  %193 = vmatprep.subr.mxu0 0.0
  %194 = vmatpush1.msra.mxu0 %v133
  %195 = vmatprep.subr.mxu0 0.0
  %196 = vmatpush1.msra.mxu0 %v132
  %197 = vmatprep.subr.mxu0 0.0
  %198 = vmatpush1.msra.mxu0 %v131
  %199 = vmatprep.subr.mxu0 0.0
  %200 = vmatpush1.msra.mxu0 %v130
  %201 = vmatprep.subr.mxu0 0.0
  %202 = vmatpush2.msra.mxu0 %v161
  %203 = vmatprep.subr.mxu0 0.0
  %204 = vmatpush2.msra.mxu0 %v160
  %205 = vmatprep.subr.mxu0 0.0
  %206 = vmatpush2.msra.mxu0 %v159
  %207 = vmatprep.subr.mxu0 0.0
  %208 = vmatpush2.msra.mxu0 %v158
  %209 = vmatprep.subr.mxu0 0.0
  %210 = vmatpush2.msra.mxu0 %v157
  %211 = vmatprep.subr.mxu0 0.0
  %212 = vmatpush2.msra.mxu0 %v156
  %213 = vmatprep.subr.mxu0 0.0
  %214 = vmatpush2.msra.mxu0 %v155
  %215 = vmatprep.subr.mxu0 0.0
  %216 = vmatpush2.msra.mxu0 %v154
  %217 = vmatprep.subr.mxu0 0.0
  %218 = vmatpush2.msra.mxu0 %v153
  %219 = vmatprep.subr.mxu0 0.0
  %220 = vmatpush2.msra.mxu0 %v152
  %221 = vmatprep.subr.mxu0 0.0
  %222 = vmatpush2.msra.mxu0 %v151
  %223 = vmatprep.subr.mxu0 0.0
  %224 = vmatpush2.msra.mxu0 %v150
  %225 = vmatprep.subr.mxu0 0.0
  %226 = vmatpush2.msra.mxu0 %v149
  %227 = vmatprep.subr.mxu0 0.0
  %228 = vmatpush2.msra.mxu0 %v148
  %229 = vmatprep.subr.mxu0 0.0
  %230 = vmatpush2.msra.mxu0 %v147
  %231 = vmatprep.subr.mxu0 0.0
  %232 = vmatpush2.msra.mxu0 %v146
  %233 = vmatprep.mubr.f32.mxu0 %v127
  %234 = vmatmul.mubr.f32.gmra.mxu0 %v126
  %v235 = vpop.f32.mrf.mxu0
  %v236 = vadd.f32 %v167, %v235
  %v237 = vpop.f32.mrf.mxu0
  %238 = vmatprep.mubr.f32.mxu0 %v129
  %239 = vmatmul.mubr.f32.gmra.mxu0 %v128
  %v240 = vpop.f32.mrf.mxu0
  %v241 = vadd.f32 %v167, %v240
  %v242 = vpop.f32.mrf.mxu0
  %243 = vdwg.mxu0
  %v244 = vtanh.pop %v236
  %v245 = vtanh.pop %v241
  %v246 = vmul.f32 %v244, 0.5
  %v247 = vmul.f32 %v245, 0.5
  %vm248 = vcmask 15360
  %249 = vst.msk [vmem:[%s5] sm:$0xff] %vm248, %v246
  %250 = vst.msk [vmem:[%s5 + $0x8] sm:$0xff] %vm248, %v247
  // Predicated region
  $region22: #{tpu_custom_call.1} parent=0 // pred_check
    _
  $region23: #{tpu_custom_call.1} parent=0 // pred_check_branch
    %252 = sbr.rel (0) target = $region25
  $region24: #{tpu_custom_call.1} parent=0 // pred_region
    _
  $region25: #{tpu_custom_call.1} parent=0 // pred_fallthru
    _
  // Predicated region
  $region26: #{tpu_custom_call.1} parent=0 // pred_check
    _
  $region27: #{tpu_custom_call.1} parent=0 // pred_check_branch
    %254 = sbr.rel (0) target = $region29
  $region28: #{tpu_custom_call.1} parent=0 // pred_region
    _
  $region29: #{tpu_custom_call.1} parent=0 // pred_fallthru
    _

</llo_original>
